<compile_context>
chip_gen: v6e
topology: v6e:2x2x1
jax: 0.10.0
libtpu: 0.0.40
codegen_flags: <defaults>
</compile_context>

<pallas_src>
import math

import jax
import jax.numpy as jnp
from jax.experimental import pallas as pl
from jax.experimental.pallas import tpu as pltpu


# --------------------------------------------------------------------------------------
# pe buffer construction (mirrors the PyTorch __init__; plain JAX, runs once per module)
# --------------------------------------------------------------------------------------
def make_positional_encoding_buffer(d_model: int, max_len: int = 5000) -> jnp.ndarray:
    """Deterministic buffer, same values as the PyTorch __init__ (shape (max_len, d_model))."""
    position = jnp.arange(0, max_len, dtype=jnp.float32)[:, None]            # (max_len, 1)
    div_term = jnp.exp(
        jnp.arange(0, d_model, 2, dtype=jnp.float32) * (-math.log(10000.0) / d_model)
    )                                                                         # (ceil(D/2),)
    angles = position * div_term                                              # (max_len, ceil(D/2))
    pe = jnp.zeros((max_len, d_model), dtype=jnp.float32)
    pe = pe.at[:, 0::2].set(jnp.sin(angles))
    pe = pe.at[:, 1::2].set(jnp.cos(angles[:, : d_model // 2]))               # odd-D safe
    return pe


# --------------------------------------------------------------------------------------
# Kernel + sizing helpers
# --------------------------------------------------------------------------------------
def _pos_enc_kernel(x_ref, pe_ref, o_ref):
    # x_ref / pe_ref / o_ref are all (tR, C): 2 vld + 1 vadd + 1 vst per vreg.
    o_ref[...] = x_ref[...] + pe_ref[...]


def _tpu_budgets():
    """Return (target_tile_bytes, vmem_limit_cap) chosen per TPU generation."""
    vmem_bytes = None
    try:
        info = pltpu.get_tpu_info()
        vmem_bytes = getattr(info, "vmem_capacity_bytes", None)
    except Exception:
        vmem_bytes = None
    if vmem_bytes is None:
        try:
            kind = jax.devices()[0].device_kind.lower()
            vmem_bytes = (64 << 20) if "v7" in kind else (128 << 20)
        except Exception:
            vmem_bytes = 64 << 20  # conservative default (v7x-class)
    if vmem_bytes <= (64 << 20):
        # v7x-class: 64 MiB physical VMEM -> ~5 MiB tiles, cap scoped limit at 40 MiB.
        return 5 << 20, 40 << 20
    # v5e / v6e: 128 MiB VMEM -> ~8 MiB tiles, cap scoped limit at 96 MiB.
    return 8 << 20, 96 << 20


def _choose_lane_layout(n_elems: int):
    """Lane-dense width C (multiple of 128) + flat-dim padding for the trailing S*D elems."""
    n_flat = ((n_elems + 127) // 128) * 128          # pad up to a multiple of 128
    for c in (2048, 1024, 512, 256, 128):
        if n_flat % c == 0:
            return c, n_flat - n_elems
    return 128, n_flat - n_elems                      # unreachable (128 always divides)


def _choose_row_tile(n_rows: int, c: int, elem_bytes: int, target_tile_bytes: int):
    """Largest row tile, rounded to the dtype's sublane-packing multiple."""
    sub = max(8, 32 // elem_bytes)                    # 8 for f32, 16 for bf16, 32 for int8/fp8
    target_rows = max(1, target_tile_bytes // (c * elem_bytes))
    if n_rows <= target_rows:
        return n_rows
    return max(sub, (target_rows // sub) * sub)


# --------------------------------------------------------------------------------------
# Module-equivalent wrapper
# --------------------------------------------------------------------------------------
class PositionalEncodingPallas:
    """Pallas-TPU PositionalEncoding: __call__(x) = x + pe[None, :S, :]."""

    def __init__(self, d_model: int, max_len: int = 5000):
        self.d_model = d_model
        self.max_len = max_len
        self.pe = make_positional_encoding_buffer(d_model, max_len)   # (max_len, D) f32
        self._pe2_cache = {}   # (S, dtype_name, R, C) -> lane-dense, dtype-matched pe tile

    def _prepared_pe(self, seq_len, dtype, n_rows, lane_w, flat_pad):
        key = (seq_len, jnp.dtype(dtype).name, n_rows, lane_w)
        pe2 = self._pe2_cache.get(key)
        if pe2 is None:
            flat = self.pe[:seq_len, :].astype(dtype).reshape(-1)
            if flat_pad:
                flat = jnp.pad(flat, (0, flat_pad))
            pe2 = jax.block_until_ready(flat.reshape(n_rows, lane_w))
            self._pe2_cache[key] = pe2
        return pe2

    def __call__(self, x: jnp.ndarray, *, donate_x: bool = False) -> jnp.ndarray:
        B, S, D = x.shape
        assert S <= self.max_len, f"seq_len {S} exceeds max_len {self.max_len}"
        assert D == self.d_model, "d_model mismatch between x and pe buffer"

        n_elems = S * D
        C, flat_pad = _choose_lane_layout(n_elems)
        n_flat = n_elems + flat_pad
        R = n_flat // C

        # Cached: no per-call pe slice/cast/reshape HBM copy.
        pe2 = self._prepared_pe(S, x.dtype, R, C, flat_pad)

        x_flat = x.reshape(B, n_elems)
        if flat_pad:
            x_flat = jnp.pad(x_flat, ((0, 0), (0, flat_pad)))
        x2 = x_flat.reshape(B, R, C)

        elem_bytes = jnp.dtype(x.dtype).itemsize
        target_tile_bytes, vmem_cap = _tpu_budgets()
        tR = _choose_row_tile(R, C, elem_bytes, target_tile_bytes)
        n_row_tiles = pl.cdiv(R, tR)
        tile_bytes = tR * C * elem_bytes
        # 3 arrays x 2-deep pipelining (~6 tiles) + headroom, capped per generation.
        vmem_limit = int(min(vmem_cap, max(8 << 20, 8 * tile_bytes)))

        out2 = pl.pallas_call(
            _pos_enc_kernel,
            out_shape=jax.ShapeDtypeStruct((B, R, C), x.dtype),
            grid_spec=pltpu.PrefetchScalarGridSpec(
                num_scalar_prefetch=0,
                # Row-tile axis OUTER, batch INNER: the shared pe tile keeps the same
                # block index across the inner batch loop -> fetched from HBM once per
                # row tile instead of once per (row tile, batch).
                grid=(n_row_tiles, B),
                in_specs=[
                    pl.BlockSpec((pl.Squeezed(), tR, C), lambda r, b: (b, r, 0)),  # x tile
                    pl.BlockSpec((tR, C), lambda r, b: (r, 0)),                    # shared pe
                ],
                out_specs=pl.BlockSpec((pl.Squeezed(), tR, C), lambda r, b: (b, r, 0)),
            ),
            compiler_params=pltpu.CompilerParams(
                # v7x megacore: shard on row tiles only, keeping pe HBM traffic at 1x.
                dimension_semantics=("parallel", "arbitrary"),
                vmem_limit_bytes=vmem_limit,
            ),
            # Alias x's HBM buffer to the output when the caller actually donates x.
            input_output_aliases=({0: 0} if donate_x else {}),
        )(x2, pe2)

        out_flat = out2.reshape(B, n_flat)
        if flat_pad:
            out_flat = out_flat[:, :n_elems]
        return out_flat.reshape(B, S, D)


if __name__ == "__main__":
    max_len = 64  # small max_len for the synthetic test (module default is 5000)

    # Test 1: shapes consistent with the module (batch=2, seq=8, d_model=32).
    B, S, D = 2, 8, 32
    x = jax.random.normal(jax.random.PRNGKey(0), (B, S, D), dtype=jnp.float32)
    module = PositionalEncodingPallas(D, max_len=max_len)
    out = jax.block_until_ready(module(x))
    ref = x + module.pe[None, :S, :]
    assert out.shape == (B, S, D)
    assert jnp.allclose(out, ref, atol=1e-6), "mismatch vs reference (test 1)"

    # Test 2: different lane width (S*D = 768, multiple of 128 but not 2048).
    B2, S2, D2 = 2, 16, 48
    x_b = jax.random.normal(jax.random.PRNGKey(0), (B2, S2, D2), dtype=jnp.float32)
    mod2 = PositionalEncodingPallas(D2, max_len=max_len)
    out_b = jax.block_until_ready(mod2(x_b))
    ref_b = x_b + mod2.pe[None, :S2, :]
    assert jnp.allclose(out_b, ref_b, atol=1e-6), "mismatch vs reference (test 2)"

    # Test 3: padded path (S*D = 480 is not a multiple of 128 -> padded flat dim).
    B3, S3, D3 = 2, 10, 48
    x_c = jax.random.normal(jax.random.PRNGKey(0), (B3, S3, D3), dtype=jnp.float32)
    mod3 = PositionalEncodingPallas(D3, max_len=max_len)
    out_c = jax.block_until_ready(mod3(x_c))
    ref_c = x_c + mod3.pe[None, :S3, :]
    assert jnp.allclose(out_c, ref_c, atol=1e-6), "mismatch vs reference (test 3)"

    # Test 4: bf16 input (dtype-aware sublane rounding + separately cached bf16 pe tile).
    x_h = x.astype(jnp.bfloat16)
    out_h = jax.block_until_ready(module(x_h))
    ref_h = x_h + module.pe[None, :S, :].astype(jnp.bfloat16)
    assert out_h.dtype == jnp.bfloat16
    assert jnp.allclose(out_h.astype(jnp.float32), ref_h.astype(jnp.float32), atol=1e-2), \
        "mismatch vs reference (test 4)"

    print("KERNEL_OK")
</pallas_src>

<mosaic_0001>
module attributes {stable_mosaic.version = 11 : i64} {
  func.func @_pos_enc_kernel(%arg0: i32, %arg1: i32, %arg2: memref<1x1x256xf32, #tpu.memory_space<vmem>>, %arg3: memref<1x256xf32, #tpu.memory_space<vmem>>, %arg4: memref<1x1x256xf32, #tpu.memory_space<vmem>>) attributes {dimension_semantics = [#tpu.dimension_semantics<parallel>, #tpu.dimension_semantics<arbitrary>], iteration_bounds = array<i64: 1, 2>, scalar_prefetch = 0 : i64, scratch_operands = 0 : i64, tpu.core_type = #tpu.core_type<tc>, window_params = [{transform_indices = @transform_0, window_bounds = array<i64: 1, 1, 256>}, {transform_indices = @transform_1, window_bounds = array<i64: 1, 256>}, {transform_indices = @transform_2, window_bounds = array<i64: 1, 1, 256>}]} {
    %c0 = arith.constant 0 : index
    %c0_0 = arith.constant 0 : index
    %c0_1 = arith.constant 0 : index
    %0 = vector.load %arg2[%c0, %c0_0, %c0_1] : memref<1x1x256xf32, #tpu.memory_space<vmem>>, vector<1x1x256xf32>
    %1 = vector.shape_cast %0 : vector<1x1x256xf32> to vector<1x256xf32>
    %c0_2 = arith.constant 0 : index
    %c0_3 = arith.constant 0 : index
    %2 = vector.load %arg3[%c0_2, %c0_3] : memref<1x256xf32, #tpu.memory_space<vmem>>, vector<1x256xf32>
    %3 = arith.addf %1, %2 : vector<1x256xf32>
    %c0_4 = arith.constant 0 : index
    %c0_5 = arith.constant 0 : index
    %c0_6 = arith.constant 0 : index
    %4 = vector.load %arg4[%c0_4, %c0_5, %c0_6] : memref<1x1x256xf32, #tpu.memory_space<vmem>>, vector<1x1x256xf32>
    %5 = vector.shape_cast %4 : vector<1x1x256xf32> to vector<1x256xf32>
    %6 = vector.shape_cast %3 : vector<1x256xf32> to vector<1x1x256xf32>
    tpu.vector_store %arg4[%c0_4, %c0_5, %c0_6], %6 {strides = array<i32>} : memref<1x1x256xf32, #tpu.memory_space<vmem>>, vector<1x1x256xf32>,
    return
  }
  func.func @transform_0(%arg0: i32, %arg1: i32) -> (i32, i32, i32) {
    %c0_i32 = arith.constant 0 : i32
    %c0_i32_0 = arith.constant 0 : i32
    return %arg1, %arg0, %c0_i32 : i32, i32, i32
  }
  func.func @transform_1(%arg0: i32, %arg1: i32) -> (i32, i32) {
    %c0_i32 = arith.constant 0 : i32
    %c0_i32_0 = arith.constant 0 : i32
    return %arg0, %c0_i32 : i32, i32
  }
  func.func @transform_2(%arg0: i32, %arg1: i32) -> (i32, i32, i32) {
    %c0_i32 = arith.constant 0 : i32
    %c0_i32_0 = arith.constant 0 : i32
    return %arg1, %arg0, %c0_i32 : i32, i32, i32
  }
}

</mosaic_0001>

<llo_original>
// kernel: tpu_custom_call.1
$region0: #{tpu_custom_call.1}
  #allocation0 [shape = 'u32[]', space=smem, size = 0x4, offset = 0x4, fixed_abs, tag = 'smem constant byte address 0x4 - core index']
  #allocation1 [shape = 'u32[144,128]{1,0:T(1,128)}', space=vmem, size = 0x12000, scoped, tag = 'internal scratch']
  %s0 = inlined_call_operand.hbm [shape: f32[2,1,256], index: 0, kind: input, shape index: {}]
  %s1 = inlined_call_operand.hbm [shape: f32[1,256], index: 1, kind: input, shape index: {}]
  %s2 = inlined_call_operand.hbm [shape: f32[2,1,256], index: 2, kind: output, shape index: {}]
  %s3 = sld [smem:[#allocation0]]
  $region49: #{tpu_custom_call.1} parent=0
    _
  %s5 = ssub.s32 1, %s3
  %s6 = scalar_select 0, %s5, %s3
  $region1: #{tpu_custom_call.1} parent=0
    #allocation2 [shape = 'u8[2048]{0}', space=vmem, size = 0x800, scoped, tag = 'input window, operand 0']
    #allocation3 [shape = 's32[2]{0}', space=sflag, size = 0x8, scoped, tag = 'scoped memory for tpu_custom_call.1']
    #allocation4 [shape = 's32[2]{0}', space=sflag, size = 0x8, scoped, tag = 'scoped memory for tpu_custom_call.1']
    #allocation5 [shape = 'u8[1024]{0}', space=vmem, size = 0x400, scoped, tag = 'input window, operand 1, single buffered']
    #allocation6 [shape = 's32[1]{0}', space=sflag, size = 0x4, scoped, tag = 'scoped memory for tpu_custom_call.1']
    #allocation7 [shape = 'u8[2048]{0}', space=vmem, size = 0x800, scoped, tag = 'output window, operand 0']
    %7 = vsyncpa [#allocation3], 0
    %s8 = scalar_lea.sflag [#allocation3], 1
    %9 = vsyncpa %s8, 0
    %10 = vsyncpa [#allocation6], 0
    %11 = vsyncpa [#allocation4], 0
    %s12 = scalar_lea.sflag [#allocation4], 1
    %13 = vsyncpa %s12, 0
    loop: start=0, step=1, limit=4
    $region2: #{tpu_custom_call.1} parent=1 // loop_pre_header
      _
    $region3: #{tpu_custom_call.1} parent=1 // loop_header
      %s15 = sphi 0, %s19
      %p16 = scmp.ge.s32.totalorder %s15, 4
      %s22 = sphi 0, %s34
      %s23 = sphi 0, %s30
      %s24 = sphi 0, %s22
      %s25 = sphi 0, %s23
      %s26 = sphi 0, %s24
      %s27 = sphi 0, %s25
      %s39 = sphi 0, %s41
      %s42 = sphi 0, %s39
      %s43 = sphi 0, %s42
      %s59 = sphi 0, %s43
      %s65 = sphi 0, %s67
      %s68 = sphi 0, %s65
      %s69 = sphi 0, %s68
      %s85 = sphi 0, %s69
      %s93 = sphi 0, %s95
      %s96 = sphi 0, %s93
      %s97 = sphi 0, %s96
      %s113 = sphi 0, %s97
    $region4: #{tpu_custom_call.1} parent=1 // loop_header_branch
      %18 = sbr.rel (%p16) target = $region8
    $region5: #{tpu_custom_call.1} parent=1 // loop_body
      %s20 = ssub.s32 %s15, 1
      %s21 = ssub.s32 %s15, 2
      %s28 = sadd.s32 1, %s23
      %p29 = scmp.ge.s32.totalorder %s28, 2
      %s30 = scalar_select %p29, 0, %s28
      %s31 = sadd.s32 1, %s22
      %s32 = scalar_select %p29, %s31, %s22
      %p33 = scmp.ge.s32.totalorder %s32, 1
      %s34 = scalar_select %p33, 0, %s32
      %s35 = ssub.s32 %s23, %s30
      %s36 = ssub.s32 %s22, %s34
      %s37 = sor.u32 %s35, %s36
      %p38 = scmp.eq.s32.totalorder %s37, 0
      %s40 = sadd.s32 %s39, 1
      %s41 = scalar_select %p38, %s39, %s40
      %p44 = pneg %p38
      %p45 = scmp.eq.s32.totalorder %s15, 1
      %p46 = por %p44, %p45
      %p47 = scmp.ne.s32.totalorder %s39, %s42
      %p48 = scmp.eq.s32.totalorder %s15, 0
      %p49 = por %p47, %p48
      %p50 = scmp.ne.s32.totalorder %s39, %s42
      %p51 = scmp.eq.s32.totalorder %s20, 1
      %p52 = por %p50, %p51
      %p53 = scmp.ne.s32.totalorder %s42, %s43
      %p54 = scmp.eq.s32.totalorder %s20, 0
      %p55 = por %p53, %p54
      %p56 = scmp.ne.s32.totalorder %s42, %s43
      %p57 = scmp.eq.s32.totalorder %s21, 1
      %p58 = por %p56, %p57
      %p60 = scmp.ne.s32.totalorder %s43, %s59
      %p61 = scmp.eq.s32.totalorder %s21, 0
      %p62 = por %p60, %p61
      %s63 = ssub.s32 %s22, %s34
      %p64 = scmp.eq.s32.totalorder %s63, 0
      %s66 = sadd.s32 %s65, 1
      %s67 = scalar_select %p64, %s65, %s66
      %p70 = pneg %p64
      %p71 = scmp.eq.s32.totalorder %s15, 1
      %p72 = por %p70, %p71
      %p73 = scmp.ne.s32.totalorder %s65, %s68
      %p74 = scmp.eq.s32.totalorder %s15, 0
      %p75 = por %p73, %p74
      %p76 = scmp.ne.s32.totalorder %s65, %s68
      %p77 = scmp.eq.s32.totalorder %s20, 1
      %p78 = por %p76, %p77
      %p79 = scmp.ne.s32.totalorder %s68, %s69
      %p80 = scmp.eq.s32.totalorder %s20, 0
      %p81 = por %p79, %p80
      %p82 = scmp.ne.s32.totalorder %s68, %s69
      %p83 = scmp.eq.s32.totalorder %s21, 1
      %p84 = por %p82, %p83
      %p86 = scmp.ne.s32.totalorder %s69, %s85
      %p87 = scmp.eq.s32.totalorder %s21, 0
      %p88 = por %p86, %p87
      %s89 = ssub.s32 %s23, %s30
      %s90 = ssub.s32 %s22, %s34
      %s91 = sor.u32 %s89, %s90
      %p92 = scmp.eq.s32.totalorder %s91, 0
      %s94 = sadd.s32 %s93, 1
      %s95 = scalar_select %p92, %s93, %s94
      %p98 = pneg %p92
      %p99 = scmp.eq.s32.totalorder %s15, 1
      %p100 = por %p98, %p99
      %p101 = scmp.ne.s32.totalorder %s93, %s96
      %p102 = scmp.eq.s32.totalorder %s15, 0
      %p103 = por %p101, %p102
      %p104 = scmp.ne.s32.totalorder %s93, %s96
      %p105 = scmp.eq.s32.totalorder %s20, 1
      %p106 = por %p104, %p105
      %p107 = scmp.ne.s32.totalorder %s96, %s97
      %p108 = scmp.eq.s32.totalorder %s20, 0
      %p109 = por %p107, %p108
      %p110 = scmp.ne.s32.totalorder %s96, %s97
      %p111 = scmp.eq.s32.totalorder %s21, 1
      %p112 = por %p110, %p111
      %p114 = scmp.ne.s32.totalorder %s97, %s113
      %p115 = scmp.eq.s32.totalorder %s21, 0
      %p116 = por %p114, %p115
      %p117 = scmp.le.s32.totalorder 1, %s15
      %p118 = scmp.lt.s32.totalorder %s15, 3
      %p119 = pnand %p117, %p118
      %p120 = pneg %p119
      // Predicated region
      $region9: #{tpu_custom_call.1} parent=5 // pred_check
        _
      $region10: #{tpu_custom_call.1} parent=5 // pred_check_branch
        %122 = sbr.rel (%p119) target = $region12
      $region11: #{tpu_custom_call.1} parent=5 // pred_region
        %s123 = ssub.s32 %s15, 1
        // Predicated region
        $region13: #{tpu_custom_call.1} parent=11 // pred_check
          %p124 = pneg %p81
        $region14: #{tpu_custom_call.1} parent=11 // pred_check_branch
          %126 = sbr.rel (%p124) target = $region16
        $region15: #{tpu_custom_call.1} parent=11 // pred_region
          %s128 = ssub.s32 32, 32
          %129 = vsyncadd [#allocation6], %s128
          %s130 = smul.addr %s24, 2
          %s131 = smul.addr %s130, 16
          %s132 = scalar_lea.hbm %s1, %s131
          %s134 = sshll.u32 [#allocation5], 4
          %s135 = int_to_ptr.vmem [resolvable:$true] %s134
          %137 = dma.hbm_to_vmem [thread:$0]  %s132, 32, %s135, [#allocation6]
        $region16: #{tpu_custom_call.1} parent=11 // pred_fallthru
          _
      $region12: #{tpu_custom_call.1} parent=5 // pred_fallthru
        _
      %p138 = scmp.lt.s32.totalorder %s15, 2
      // Predicated region
      $region17: #{tpu_custom_call.1} parent=5 // pred_check
        %p139 = pneg %p138
      $region18: #{tpu_custom_call.1} parent=5 // pred_check_branch
        %141 = sbr.rel (%p139) target = $region20
      $region19: #{tpu_custom_call.1} parent=5 // pred_region
        // Predicated region
        $region21: #{tpu_custom_call.1} parent=19 // pred_check
          %p142 = pneg %p49
        $region22: #{tpu_custom_call.1} parent=19 // pred_check_branch
          %144 = sbr.rel (%p142) target = $region24
        $region23: #{tpu_custom_call.1} parent=19 // pred_region
          %s145 = sand.u32 %s39, 1
          %s146 = scalar_lea.sflag [#allocation3], %s145
          %s147 = sand.u32 %s39, 1
          %s148 = smul.addr %s147, 2
          %s149 = scalar_lea.vmem [#allocation2], %s148
          %s151 = ssub.s32 32, 32
          %152 = vsyncadd %s146, %s151
          %s153 = smul.addr %s22, 2
          %s154 = smul.addr %s23, 2
          %s155 = sadd.s32 %s153, %s154
          %s156 = smul.addr %s155, 16
          %s157 = scalar_lea.hbm %s0, %s156
          %s159 = sshll.u32 %s149, 4
          %s160 = int_to_ptr.vmem [resolvable:$true] %s159
          %162 = dma.hbm_to_vmem [thread:$0]  %s157, 32, %s160, %s146
        $region24: #{tpu_custom_call.1} parent=19 // pred_fallthru
          _
      $region20: #{tpu_custom_call.1} parent=5 // pred_fallthru
        _
      %p163 = scmp.le.s32.totalorder 1, %s15
      %p164 = scmp.lt.s32.totalorder %s15, 3
      %p165 = pnand %p163, %p164
      %p166 = pneg %p165
      // Predicated region
      $region25: #{tpu_custom_call.1} parent=5 // pred_check
        _
      $region26: #{tpu_custom_call.1} parent=5 // pred_check_branch
        %168 = sbr.rel (%p165) target = $region28
      $region27: #{tpu_custom_call.1} parent=5 // pred_region
        %s169 = ssub.s32 %s15, 1
        %s170 = sand.u32 %s42, 1
        %s171 = scalar_lea.sflag [#allocation3], %s170
        %s172 = sand.u32 %s42, 1
        %s173 = smul.addr %s172, 2
        %s174 = scalar_lea.vmem [#allocation2], %s173
        // Predicated region
        $region29: #{tpu_custom_call.1} parent=27 // pred_check
          %p175 = pneg %p55
        $region30: #{tpu_custom_call.1} parent=27 // pred_check_branch
          %177 = sbr.rel (%p175) target = $region32
        $region31: #{tpu_custom_call.1} parent=27 // pred_region
          %178 = dma.done %s171, 32
        $region32: #{tpu_custom_call.1} parent=27 // pred_fallthru
          _
        // Predicated region
        $region33: #{tpu_custom_call.1} parent=27 // pred_check
          %p179 = pneg %p81
        $region34: #{tpu_custom_call.1} parent=27 // pred_check_branch
          %181 = sbr.rel (%p179) target = $region36
        $region35: #{tpu_custom_call.1} parent=27 // pred_region
          %182 = dma.done [#allocation6], 32
        $region36: #{tpu_custom_call.1} parent=27 // pred_fallthru
          _
        %s183 = sand.u32 %s42, 1
        %s184 = scalar_lea.sflag [#allocation3], %s183
        %s185 = sand.u32 %s42, 1
        %s186 = smul.addr %s185, 2
        %s187 = scalar_lea.vmem [#allocation2], %s186
        %p188 = pneg %p55
        %p189 = pneg %p52
        %p190 = pneg %p81
        %p191 = pneg %p78
        %p192 = pneg %p109
        %p193 = pneg %p106
        %s194 = sand.u32 %s96, 1
        %s195 = scalar_lea.sflag [#allocation4], %s194
        %s196 = sand.u32 %s96, 1
        %s197 = smul.addr %s196, 2
        %s198 = scalar_lea.vmem [#allocation7], %s197
        %v199 = vld [vmem:[%s174] sm:$0x3]
        %v200 = vld [vmem:[#allocation5] sm:$0x3]
        %v201 = vadd.f32 %v199, %v200
        %v202 = vlaneseq
        %vm203 = vcmp.ge.s32.totalorder %v202, 0
        %vm204 = vcmp.lt.s32.totalorder %v202, 256
        %vm205 = vmand %vm203, %vm204
        %206 = vst.msk [vmem:[%s198] sm:$0x3] %vm205, %v201
        %s207 = sand.u32 %s96, 1
        %s208 = scalar_lea.sflag [#allocation4], %s207
        %s209 = sand.u32 %s96, 1
        %s210 = smul.addr %s209, 2
        %s211 = scalar_lea.vmem [#allocation7], %s210
        // Predicated region
        $region37: #{tpu_custom_call.1} parent=27 // pred_check
          %p212 = pneg %p106
        $region38: #{tpu_custom_call.1} parent=27 // pred_check_branch
          %214 = sbr.rel (%p212) target = $region40
        $region39: #{tpu_custom_call.1} parent=27 // pred_region
          %s216 = ssub.s32 32, 32
          %217 = vsyncadd %s208, %s216
          %s218 = smul.addr %s24, 2
          %s219 = smul.addr %s25, 2
          %s220 = sadd.s32 %s218, %s219
          %s221 = smul.addr %s220, 16
          %s222 = scalar_lea.hbm %s2, %s221
          %s224 = sshll.u32 %s211, 4
          %s225 = int_to_ptr.vmem [resolvable:$true] %s224
          %227 = dma.vmem_to_hbm [thread:$0]  %s225, 32, %s222, %s208
        $region40: #{tpu_custom_call.1} parent=27 // pred_fallthru
          _
      $region28: #{tpu_custom_call.1} parent=5 // pred_fallthru
        _
      %p228 = scmp.le.s32.totalorder 2, %s15
      // Predicated region
      $region41: #{tpu_custom_call.1} parent=5 // pred_check
        %p229 = pneg %p228
      $region42: #{tpu_custom_call.1} parent=5 // pred_check_branch
        %231 = sbr.rel (%p229) target = $region44
      $region43: #{tpu_custom_call.1} parent=5 // pred_region
        %s232 = ssub.s32 %s15, 2
        // Predicated region
        $region45: #{tpu_custom_call.1} parent=43 // pred_check
          %p233 = pneg %p112
        $region46: #{tpu_custom_call.1} parent=43 // pred_check_branch
          %235 = sbr.rel (%p233) target = $region48
        $region47: #{tpu_custom_call.1} parent=43 // pred_region
          %s236 = sand.u32 %s97, 1
          %s237 = scalar_lea.sflag [#allocation4], %s236
          %s238 = sand.u32 %s97, 1
          %s239 = smul.addr %s238, 2
          %s240 = scalar_lea.vmem [#allocation7], %s239
          %241 = dma.done %s237, 32
        $region48: #{tpu_custom_call.1} parent=43 // pred_fallthru
          _
      $region44: #{tpu_custom_call.1} parent=5 // pred_fallthru
        _
    $region6: #{tpu_custom_call.1} parent=1 // loop_footer
      %s19 = sadd.s32 1, %s15
    $region7: #{tpu_custom_call.1} parent=1 // loop_footer_branch
      %14 = sbr.rel target = $region3
    $region8: #{tpu_custom_call.1} parent=1 // loop_exit
      _
    %242 = vsyncpa [#allocation3], 1
    %s243 = scalar_lea.sflag [#allocation3], 1
    %244 = vsyncpa %s243, 1
    %245 = vsyncpa [#allocation6], 1
    %246 = vsyncpa [#allocation4], 1
    %s247 = scalar_lea.sflag [#allocation4], 1
    %248 = vsyncpa %s247, 1

</llo_original>
